<compile_context>
chip_gen: v7x
topology: tpu7x:2x2x1
jax: 0.10.0
libtpu: 0.0.40
codegen_flags: <defaults>
</compile_context>

<pallas_src>
import functools

import jax
import jax.numpy as jnp
from jax.experimental import pallas as pl
from jax.experimental.pallas import tpu as pltpu

H1 = 400
H2 = 300
H1_PAD = 512     # 400 rounded up to a multiple of 128
H2_PAD = 384     # 300 rounded up to a multiple of 128


def critic_kernel(x_ref, a_ref,
                  w1_ref, b1_ref,
                  w2x_ref, w2a_ref, b2_ref,
                  w3_ref, b3_ref,
                  q_ref):
    # fc1 + ReLU: bf16 MXU operands, f32 accumulation, f32 VPU bias/ReLU.
    h1 = jnp.dot(x_ref[...], w1_ref[...], preferred_element_type=jnp.float32)
    h1 = jnp.maximum(h1 + b1_ref[...], 0.0)

    # fc2 on concat([h1, actions]) expressed as a split matmul, + ReLU.
    h2 = (jnp.dot(h1.astype(w2x_ref.dtype), w2x_ref[...],
                  preferred_element_type=jnp.float32)
          + jnp.dot(a_ref[...], w2a_ref[...],
                    preferred_element_type=jnp.float32)
          + b2_ref[...])
    h2 = jnp.maximum(h2, 0.0)

    # q_out: lane-major MXU dot.  w3 (8, K) contracted against h2 (tm, K) on
    # their last dims -> (8, tm); only row 0 of w3 is real (rows 1..7 zero).
    q8 = jax.lax.dot_general(
        w3_ref[...], h2.astype(w3_ref.dtype),
        dimension_numbers=(((1,), (1,)), ((), ())),
        preferred_element_type=jnp.float32)

    # Lane-dense (1, tm) store; b3 is a scalar read from SMEM.
    q_ref[0] = q8[0:1, :] + b3_ref[0]


def _round_up(n, m):
    return ((n + m - 1) // m) * m


def _choose_tiles(B, tm_max):
    """Return (padded batch, batch tile) such that tile divides padded batch."""
    if B <= 256:
        b_pad = max(8, _round_up(B, 8))
        return b_pad, b_pad                    # one grid step
    if B <= 2 * tm_max:
        b_pad = _round_up(B, 512)
        return b_pad, b_pad // 2               # exactly two grid steps (v7x: 2 TCs)
    b_pad = _round_up(B, tm_max)
    return b_pad, tm_max


@functools.partial(jax.jit, static_argnames=("tm_max",))
def critic_forward(x, actions, params, *, tm_max=1024):
    """x: (B, obs_dims) f32, actions: (B, action_dims) f32 -> (B, 1) f32."""
    B = x.shape[0]
    w1, b1, w2x, w2a, b2, w3, b3 = params      # weights already bf16 + padded

    b_pad, tm = _choose_tiles(B, tm_max)
    if b_pad != B:
        x = jnp.pad(x, ((0, b_pad - B), (0, 0)))
        actions = jnp.pad(actions, ((0, b_pad - B), (0, 0)))

    obs = x.shape[1]
    act = actions.shape[1]
    num_tiles = b_pad // tm

    # Only the activations are cast per call (weights are pre-cast in params).
    x_bf = x.astype(jnp.bfloat16)
    a_bf = actions.astype(jnp.bfloat16)

    def row_spec(feat):                        # activation tiles: walk the batch
        return pl.BlockSpec((tm, feat), lambda i: (i, 0))

    def pinned(r, c):                          # weights/biases: VMEM-resident
        return pl.BlockSpec((r, c), lambda i: (0, 0))

    flops = 2 * b_pad * (obs * H1_PAD + H1_PAD * H2_PAD + act * H2_PAD
                         + 8 * H2_PAD)
    bytes_accessed = (x_bf.size * 2 + a_bf.size * 2
                      + (w1.size + w2x.size + w2a.size + w3.size) * 2
                      + (b1.size + b2.size + b3.size) * 4
                      + b_pad * 4)

    q_rows = pl.pallas_call(
        critic_kernel,
        out_shape=jax.ShapeDtypeStruct((num_tiles, 1, tm), jnp.float32),
        grid=(num_tiles,),
        in_specs=[
            row_spec(obs), row_spec(act),
            pinned(obs, H1_PAD), pinned(1, H1_PAD),
            pinned(H1_PAD, H2_PAD), pinned(act, H2_PAD), pinned(1, H2_PAD),
            pinned(8, H2_PAD),
            pl.BlockSpec(memory_space=pltpu.MemorySpace.SMEM),   # b3 scalar
        ],
        out_specs=pl.BlockSpec((1, 1, tm), lambda i: (i, 0, 0)),
        compiler_params=pltpu.CompilerParams(
            dimension_semantics=("parallel",)),
        cost_estimate=pl.CostEstimate(
            flops=int(flops), transcendentals=0,
            bytes_accessed=int(bytes_accessed)),
    )(x_bf, a_bf, w1, b1, w2x, w2a, b2, w3, b3)

    return q_rows.reshape(b_pad)[:B].reshape(B, 1)


def init_params(key, obs_dims, action_dims):
    """PyTorch nn.Linear-style init (uniform +-1/sqrt(fan_in)).

    Weights are stored kernel-ready: zero-padded 400->512 / 300->384 (padding
    is exactly inert through ReLU and the zero columns/rows), pre-cast to
    bf16, with q_out's weight stored as an (8, H2_PAD) block (row 0 real).
    """
    ks = jax.random.split(key, 6)

    def unif(k, shape, fan_in):
        bound = 1.0 / jnp.sqrt(jnp.float32(fan_in))
        return jax.random.uniform(k, shape, jnp.float32, -bound, bound)

    # fc1: Linear(obs_dims, 400), stored (in, out), padded to (obs, 512).
    w1 = unif(ks[0], (obs_dims, H1), obs_dims)
    b1 = unif(ks[1], (1, H1), obs_dims)
    w1 = jnp.pad(w1, ((0, 0), (0, H1_PAD - H1))).astype(jnp.bfloat16)
    b1 = jnp.pad(b1, ((0, 0), (0, H1_PAD - H1)))

    # fc2: Linear(400 + action_dims, 300), split [h1-part | action-part],
    # padded to (512, 384) / (action_dims, 384).
    fan2 = H1 + action_dims
    w2_full = unif(ks[2], (fan2, H2), fan2)
    b2 = unif(ks[3], (1, H2), fan2)
    w2x = jnp.pad(w2_full[:H1],
                  ((0, H1_PAD - H1), (0, H2_PAD - H2))).astype(jnp.bfloat16)
    w2a = jnp.pad(w2_full[H1:],
                  ((0, 0), (0, H2_PAD - H2))).astype(jnp.bfloat16)
    b2 = jnp.pad(b2, ((0, 0), (0, H2_PAD - H2)))

    # q_out: Linear(300, 1); weight *= 0.1, bias zeroed (as in __init__).
    # Stored as (8, 384) bf16: row 0 = weights, rows 1..7 zero (MXU-friendly).
    w3 = unif(ks[4], (1, H2), H2) * 0.1
    w3 = jnp.pad(w3, ((0, 7), (0, H2_PAD - H2))).astype(jnp.bfloat16)
    b3 = jnp.zeros((1,), jnp.float32)          # scalar, passed via SMEM

    return (w1, b1, w2x, w2a, b2, w3, b3)


def critic_reference(x, actions, params):
    """Pure-JAX reference with matching bf16-operand / f32-accumulate numerics."""
    w1, b1, w2x, w2a, b2, w3, b3 = params
    xb, ab = x.astype(jnp.bfloat16), actions.astype(jnp.bfloat16)
    h1 = jnp.dot(xb, w1, preferred_element_type=jnp.float32) + b1
    h1 = jnp.maximum(h1, 0.0)
    h2 = (jnp.dot(h1.astype(jnp.bfloat16), w2x,
                  preferred_element_type=jnp.float32)
          + jnp.dot(ab, w2a, preferred_element_type=jnp.float32)
          + b2)
    h2 = jnp.maximum(h2, 0.0)
    q = jnp.dot(h2.astype(jnp.bfloat16), w3[0:1].T,
                preferred_element_type=jnp.float32) + b3[0]
    return q


if __name__ == "__main__":
    obs_dims, action_dims, batch = 16, 4, 2

    key = jax.random.PRNGKey(0)
    k_params, k_x, k_a = jax.random.split(key, 3)

    params = init_params(k_params, obs_dims, action_dims)
    x = jax.random.normal(k_x, (batch, obs_dims), jnp.float32)
    actions = jax.random.normal(k_a, (batch, action_dims), jnp.float32)

    q = critic_forward(x, actions, params)
    q = jax.block_until_ready(q)

    q_ref = critic_reference(x, actions, params)
    assert q.shape == (batch, 1), q.shape
    assert jnp.allclose(q, q_ref, atol=1e-2, rtol=1e-2), (q, q_ref)

    print("KERNEL_OK")
</pallas_src>

<mosaic_0001>
module attributes {stable_mosaic.version = 11 : i64} {
  func.func @critic_kernel(%arg0: i32, %arg1: memref<8x16xbf16, #tpu.memory_space<vmem>>, %arg2: memref<8x4xbf16, #tpu.memory_space<vmem>>, %arg3: memref<16x512xbf16, #tpu.memory_space<vmem>>, %arg4: memref<1x512xf32, #tpu.memory_space<vmem>>, %arg5: memref<512x384xbf16, #tpu.memory_space<vmem>>, %arg6: memref<4x384xbf16, #tpu.memory_space<vmem>>, %arg7: memref<1x384xf32, #tpu.memory_space<vmem>>, %arg8: memref<8x384xbf16, #tpu.memory_space<vmem>>, %arg9: memref<1xf32, #tpu.memory_space<smem>>, %arg10: memref<1x1x8xf32, #tpu.memory_space<vmem>>) attributes {dimension_semantics = [#tpu.dimension_semantics<parallel>], iteration_bounds = array<i64: 1>, scalar_prefetch = 0 : i64, scratch_operands = 0 : i64, tpu.core_type = #tpu.core_type<tc>, window_params = [{transform_indices = @transform_0, window_bounds = array<i64: 8, 16>}, {transform_indices = @transform_1, window_bounds = array<i64: 8, 4>}, {pipeline_mode = #tpu.pipeline_mode<synchronous>, transform_indices = @transform_2, window_bounds = array<i64: 16, 512>}, {pipeline_mode = #tpu.pipeline_mode<synchronous>, transform_indices = @transform_3, window_bounds = array<i64: 1, 512>}, {pipeline_mode = #tpu.pipeline_mode<synchronous>, transform_indices = @transform_4, window_bounds = array<i64: 512, 384>}, {pipeline_mode = #tpu.pipeline_mode<synchronous>, transform_indices = @transform_5, window_bounds = array<i64: 4, 384>}, {pipeline_mode = #tpu.pipeline_mode<synchronous>, transform_indices = @transform_6, window_bounds = array<i64: 1, 384>}, {pipeline_mode = #tpu.pipeline_mode<synchronous>, transform_indices = @transform_7, window_bounds = array<i64: 8, 384>}, {transform_indices = @transform_8, window_bounds = array<i64: 1>}, {transform_indices = @transform_9, window_bounds = array<i64: 1, 1, 8>}]} {
    %c0 = arith.constant 0 : index
    %c0_0 = arith.constant 0 : index
    %0 = vector.load %arg1[%c0, %c0_0] : memref<8x16xbf16, #tpu.memory_space<vmem>>, vector<8x16xbf16>
    %c0_1 = arith.constant 0 : index
    %c0_2 = arith.constant 0 : index
    %1 = vector.load %arg3[%c0_1, %c0_2] : memref<16x512xbf16, #tpu.memory_space<vmem>>, vector<16x512xbf16>
    %cst = arith.constant dense<0.000000e+00> : vector<8x512xf32>
    %2 = tpu.matmul %0, %1, %cst {dimension_numbers = #tpu.dot_dimension_numbers<[1], [0], [0], [1], [0, 0, 1, 1], [], []>} : vector<8x16xbf16>, vector<16x512xbf16>, vector<8x512xf32> -> vector<8x512xf32>
    %c0_3 = arith.constant 0 : index
    %c0_4 = arith.constant 0 : index
    %3 = vector.load %arg4[%c0_3, %c0_4] : memref<1x512xf32, #tpu.memory_space<vmem>>, vector<1x512xf32>
    %4 = vector.broadcast %3 : vector<1x512xf32> to vector<8x512xf32>
    %5 = arith.addf %2, %4 : vector<8x512xf32>
    %cst_5 = arith.constant 0.000000e+00 : f32
    %6 = vector.broadcast %cst_5 : f32 to vector<8x512xf32>
    %7 = arith.maximumf %5, %6 : vector<8x512xf32>
    %8 = arith.truncf %7 : vector<8x512xf32> to vector<8x512xbf16>
    %c0_6 = arith.constant 0 : index
    %c0_7 = arith.constant 0 : index
    %9 = vector.load %arg5[%c0_6, %c0_7] : memref<512x384xbf16, #tpu.memory_space<vmem>>, vector<512x384xbf16>
    %cst_8 = arith.constant dense<0.000000e+00> : vector<8x384xf32>
    %10 = tpu.matmul %8, %9, %cst_8 {dimension_numbers = #tpu.dot_dimension_numbers<[1], [0], [0], [1], [0, 0, 1, 1], [], []>} : vector<8x512xbf16>, vector<512x384xbf16>, vector<8x384xf32> -> vector<8x384xf32>
    %c0_9 = arith.constant 0 : index
    %c0_10 = arith.constant 0 : index
    %11 = vector.load %arg2[%c0_9, %c0_10] : memref<8x4xbf16, #tpu.memory_space<vmem>>, vector<8x4xbf16>
    %c0_11 = arith.constant 0 : index
    %c0_12 = arith.constant 0 : index
    %12 = vector.load %arg6[%c0_11, %c0_12] : memref<4x384xbf16, #tpu.memory_space<vmem>>, vector<4x384xbf16>
    %cst_13 = arith.constant dense<0.000000e+00> : vector<8x384xf32>
    %13 = tpu.matmul %11, %12, %cst_13 {dimension_numbers = #tpu.dot_dimension_numbers<[1], [0], [0], [1], [0, 0, 1, 1], [], []>} : vector<8x4xbf16>, vector<4x384xbf16>, vector<8x384xf32> -> vector<8x384xf32>
    %14 = arith.addf %10, %13 : vector<8x384xf32>
    %c0_14 = arith.constant 0 : index
    %c0_15 = arith.constant 0 : index
    %15 = vector.load %arg7[%c0_14, %c0_15] : memref<1x384xf32, #tpu.memory_space<vmem>>, vector<1x384xf32>
    %16 = vector.broadcast %15 : vector<1x384xf32> to vector<8x384xf32>
    %17 = arith.addf %14, %16 : vector<8x384xf32>
    %cst_16 = arith.constant 0.000000e+00 : f32
    %18 = vector.broadcast %cst_16 : f32 to vector<8x384xf32>
    %19 = arith.maximumf %17, %18 : vector<8x384xf32>
    %c0_17 = arith.constant 0 : index
    %c0_18 = arith.constant 0 : index
    %20 = vector.load %arg8[%c0_17, %c0_18] : memref<8x384xbf16, #tpu.memory_space<vmem>>, vector<8x384xbf16>
    %21 = arith.truncf %19 : vector<8x384xf32> to vector<8x384xbf16>
    %cst_19 = arith.constant dense<0.000000e+00> : vector<8x8xf32>
    %22 = tpu.matmul %20, %21, %cst_19 {dimension_numbers = #tpu.dot_dimension_numbers<[1], [1], [0], [0], [0, 0, 1, 0], [], []>} : vector<8x384xbf16>, vector<8x384xbf16>, vector<8x8xf32> -> vector<8x8xf32>
    %23 = vector.extract_strided_slice %22 {offsets = [0, 0], sizes = [1, 8], strides = [1, 1]} : vector<8x8xf32> to vector<1x8xf32>
    %c0_20 = arith.constant 0 : index
    %24 = memref.load %arg9[%c0_20] : memref<1xf32, #tpu.memory_space<smem>>
    %25 = vector.broadcast %24 : f32 to vector<1x8xf32>
    %26 = arith.addf %23, %25 : vector<1x8xf32>
    %c0_21 = arith.constant 0 : index
    %c0_22 = arith.constant 0 : index
    %c0_23 = arith.constant 0 : index
    %27 = vector.load %arg10[%c0_21, %c0_22, %c0_23] : memref<1x1x8xf32, #tpu.memory_space<vmem>>, vector<1x1x8xf32>
    %28 = vector.shape_cast %27 : vector<1x1x8xf32> to vector<1x8xf32>
    %29 = vector.shape_cast %26 : vector<1x8xf32> to vector<1x1x8xf32>
    tpu.vector_store %arg10[%c0_21, %c0_22, %c0_23], %29 {strides = array<i32>} : memref<1x1x8xf32, #tpu.memory_space<vmem>>, vector<1x1x8xf32>,
    return
  }
  func.func @transform_0(%arg0: i32) -> (i32, i32) {
    %c0_i32 = arith.constant 0 : i32
    %c0_i32_0 = arith.constant 0 : i32
    return %arg0, %c0_i32 : i32, i32
  }
  func.func @transform_1(%arg0: i32) -> (i32, i32) {
    %c0_i32 = arith.constant 0 : i32
    %c0_i32_0 = arith.constant 0 : i32
    return %arg0, %c0_i32 : i32, i32
  }
  func.func @transform_2(%arg0: i32) -> (i32, i32) {
    %c0_i32 = arith.constant 0 : i32
    %c0_i32_0 = arith.constant 0 : i32
    %c0_i32_1 = arith.constant 0 : i32
    return %c0_i32, %c0_i32_0 : i32, i32
  }
  func.func @transform_3(%arg0: i32) -> (i32, i32) {
    %c0_i32 = arith.constant 0 : i32
    %c0_i32_0 = arith.constant 0 : i32
    %c0_i32_1 = arith.constant 0 : i32
    return %c0_i32, %c0_i32_0 : i32, i32
  }
  func.func @transform_4(%arg0: i32) -> (i32, i32) {
    %c0_i32 = arith.constant 0 : i32
    %c0_i32_0 = arith.constant 0 : i32
    %c0_i32_1 = arith.constant 0 : i32
    return %c0_i32, %c0_i32_0 : i32, i32
  }
  func.func @transform_5(%arg0: i32) -> (i32, i32) {
    %c0_i32 = arith.constant 0 : i32
    %c0_i32_0 = arith.constant 0 : i32
    %c0_i32_1 = arith.constant 0 : i32
    return %c0_i32, %c0_i32_0 : i32, i32
  }
  func.func @transform_6(%arg0: i32) -> (i32, i32) {
    %c0_i32 = arith.constant 0 : i32
    %c0_i32_0 = arith.constant 0 : i32
    %c0_i32_1 = arith.constant 0 : i32
    return %c0_i32, %c0_i32_0 : i32, i32
  }
  func.func @transform_7(%arg0: i32) -> (i32, i32) {
    %c0_i32 = arith.constant 0 : i32
    %c0_i32_0 = arith.constant 0 : i32
    %c0_i32_1 = arith.constant 0 : i32
    return %c0_i32, %c0_i32_0 : i32, i32
  }
  func.func @transform_8(%arg0: i32) -> i32 {
    %c0_i32 = arith.constant 0 : i32
    %c0_i32_0 = arith.constant 0 : i32
    return %c0_i32 : i32
  }
  func.func @transform_9(%arg0: i32) -> (i32, i32, i32) {
    %c0_i32 = arith.constant 0 : i32
    %c0_i32_0 = arith.constant 0 : i32
    %c0_i32_1 = arith.constant 0 : i32
    return %arg0, %c0_i32, %c0_i32_0 : i32, i32, i32
  }
}

</mosaic_0001>

<llo_original>
// kernel: critic_forward.1
$region0: #{critic_forward.1}
  #allocation0 [shape = 'u32[]', space=smem, size = 0x4, offset = 0x4, fixed_abs, tag = 'smem constant byte address 0x4 - core index']
  #allocation1 [shape = 'u32[144,128]{1,0:T(1,128)}', space=vmem, size = 0x12000, scoped, tag = 'internal scratch']
  #allocation2 [shape = 'f32[1]{0:T(128)S(6)}', space=smem, size = 0x200, scoped, tag = 'scoped memory for critic_forward.1']
  %s0 = inlined_call_operand.vmem [shape: bf16[8,16], index: 0, kind: input, shape index: {}]
  %s1 = inlined_call_operand.vmem [shape: bf16[8,4], index: 1, kind: input, shape index: {}]
  %s2 = inlined_call_operand.hbm [shape: bf16[16,512], index: 2, kind: input, shape index: {}]
  %s3 = inlined_call_operand.vmem [shape: f32[1,512], index: 3, kind: input, shape index: {}]
  %s4 = inlined_call_operand.hbm [shape: bf16[512,384], index: 4, kind: input, shape index: {}]
  %s5 = inlined_call_operand.vmem [shape: bf16[4,384], index: 5, kind: input, shape index: {}]
  %s6 = inlined_call_operand.vmem [shape: f32[1,384], index: 6, kind: input, shape index: {}]
  %s7 = inlined_call_operand.vmem [shape: bf16[8,384], index: 7, kind: input, shape index: {}]
  %s8 = inlined_call_operand.<no memory space> [shape: f32[1], index: 8, kind: input, shape index: {}]
  %s9 = inlined_call_operand.vmem [shape: f32[1,1,8], index: 9, kind: output, shape index: {}]
  %s10 = sld [smem:[#allocation0]]
  $region54: #{critic_forward.1} parent=0
    _
  %s12 = ssub.s32 1, %s10
  %s13 = scalar_select 0, %s12, %s10
  %14 = sst [smem:[#allocation2]] %s8
  $region1: #{critic_forward.1} parent=0
    #allocation3 [shape = 'u8[16384]{0}', space=vmem, size = 0x4000, scoped, tag = 'input window, operand 2, single buffered']
    #allocation4 [shape = 's32[1]{0}', space=sflag, size = 0x4, scoped, tag = 'scoped memory for critic_forward.1']
    #allocation5 [shape = 'u8[393216]{0}', space=vmem, size = 0x60000, scoped, tag = 'input window, operand 4, single buffered']
    #allocation6 [shape = 's32[1]{0}', space=sflag, size = 0x4, scoped, tag = 'scoped memory for critic_forward.1']
    %15 = vsyncpa [#allocation4], 0
    %16 = vsyncpa [#allocation6], 0
    // Predicated region
    $region2: #{critic_forward.1} parent=1 // pred_check
      _
    $region3: #{critic_forward.1} parent=1 // pred_check_branch
      %18 = sbr.rel (0) target = $region5
    $region4: #{critic_forward.1} parent=1 // pred_region
      _
    $region5: #{critic_forward.1} parent=1 // pred_fallthru
      _
    // Predicated region
    $region6: #{critic_forward.1} parent=1 // pred_check
      _
    $region7: #{critic_forward.1} parent=1 // pred_check_branch
      %20 = sbr.rel (0) target = $region9
    $region8: #{critic_forward.1} parent=1 // pred_region
      _
    $region9: #{critic_forward.1} parent=1 // pred_fallthru
      _
    // Predicated region
    $region10: #{critic_forward.1} parent=1 // pred_check
      _
    $region11: #{critic_forward.1} parent=1 // pred_check_branch
      %22 = sbr.rel (0) target = $region13
    $region12: #{critic_forward.1} parent=1 // pred_region
      %s24 = ssub.s32 512, 512
      %25 = vsyncadd [#allocation4], %s24
      %s26 = sshll.u32 [#allocation3], 4
      %s27 = int_to_ptr.vmem [resolvable:$true] %s26
      %32 = dma.hbm_to_vmem [thread:$0]  %s2, 512, %s27, [#allocation4], 256, 256, 16
    $region13: #{critic_forward.1} parent=1 // pred_fallthru
      _
    // Predicated region
    $region14: #{critic_forward.1} parent=1 // pred_check
      _
    $region15: #{critic_forward.1} parent=1 // pred_check_branch
      %34 = sbr.rel (0) target = $region17
    $region16: #{critic_forward.1} parent=1 // pred_region
      _
    $region17: #{critic_forward.1} parent=1 // pred_fallthru
      _
    // Predicated region
    $region18: #{critic_forward.1} parent=1 // pred_check
      _
    $region19: #{critic_forward.1} parent=1 // pred_check_branch
      %36 = sbr.rel (0) target = $region21
    $region20: #{critic_forward.1} parent=1 // pred_region
      %s38 = ssub.s32 12288, 12288
      %39 = vsyncadd [#allocation6], %s38
      %s40 = sshll.u32 [#allocation5], 4
      %s41 = int_to_ptr.vmem [resolvable:$true] %s40
      %46 = dma.hbm_to_vmem [thread:$0]  %s4, 12288, %s41, [#allocation6], 192, 192, 12
    $region21: #{critic_forward.1} parent=1 // pred_fallthru
      _
    // Predicated region
    $region22: #{critic_forward.1} parent=1 // pred_check
      _
    $region23: #{critic_forward.1} parent=1 // pred_check_branch
      %48 = sbr.rel (0) target = $region25
    $region24: #{critic_forward.1} parent=1 // pred_region
      _
    $region25: #{critic_forward.1} parent=1 // pred_fallthru
      _
    // Predicated region
    $region26: #{critic_forward.1} parent=1 // pred_check
      _
    $region27: #{critic_forward.1} parent=1 // pred_check_branch
      %50 = sbr.rel (0) target = $region29
    $region28: #{critic_forward.1} parent=1 // pred_region
      _
    $region29: #{critic_forward.1} parent=1 // pred_fallthru
      _
    // Predicated region
    $region30: #{critic_forward.1} parent=1 // pred_check
      _
    $region31: #{critic_forward.1} parent=1 // pred_check_branch
      %52 = sbr.rel (0) target = $region33
    $region32: #{critic_forward.1} parent=1 // pred_region
      _
    $region33: #{critic_forward.1} parent=1 // pred_fallthru
      _
    // Predicated region
    $region34: #{critic_forward.1} parent=1 // pred_check
      _
    $region35: #{critic_forward.1} parent=1 // pred_check_branch
      %54 = sbr.rel (0) target = $region37
    $region36: #{critic_forward.1} parent=1 // pred_region
      _
    $region37: #{critic_forward.1} parent=1 // pred_fallthru
      _
    // Predicated region
    $region38: #{critic_forward.1} parent=1 // pred_check
      _
    $region39: #{critic_forward.1} parent=1 // pred_check_branch
      %56 = sbr.rel (0) target = $region41
    $region40: #{critic_forward.1} parent=1 // pred_region
      %57 = dma.done [#allocation4], 512
    $region41: #{critic_forward.1} parent=1 // pred_fallthru
      _
    // Predicated region
    $region42: #{critic_forward.1} parent=1 // pred_check
      _
    $region43: #{critic_forward.1} parent=1 // pred_check_branch
      %59 = sbr.rel (0) target = $region45
    $region44: #{critic_forward.1} parent=1 // pred_region
      %60 = dma.done [#allocation6], 12288
    $region45: #{critic_forward.1} parent=1 // pred_fallthru
      _
    %v62 = vld [vmem:[%s0] sm:$0xf]
    %v63 = vld [vmem:[#allocation3] sm:$0xff]
    %v64 = vld [vmem:[#allocation3 + $0x8] sm:$0xff]
    %v65 = vld [vmem:[#allocation3 + $0x10] sm:$0xff]
    %v66 = vld [vmem:[#allocation3 + $0x18] sm:$0xff]
    %v67 = vld [vmem:[%s3] sm:$0xf]
    %v69 = vlaneseq
    %v70 = vshrl.u32 %v69, 7
    %v71 = vsub.s32 0, %v70
    %v72 = vrot.slane %v67, %v71
    %v73 = vlaneseq
    %v74 = vshrl.u32 %v73, 7
    %v75 = vsub.s32 1, %v74
    %v76 = vrot.slane %v67, %v75
    %v77 = vlaneseq
    %v78 = vshrl.u32 %v77, 7
    %v79 = vsub.s32 2, %v78
    %v80 = vrot.slane %v67, %v79
    %v81 = vlaneseq
    %v82 = vshrl.u32 %v81, 7
    %v83 = vsub.s32 3, %v82
    %v84 = vrot.slane %v67, %v83
    %v93 = vunpack.c.l.b16 %v63
    %v94 = vunpack.c.h.b16 %v63
    %v95 = vunpack.c.l.b16 %v64
    %v96 = vunpack.c.h.b16 %v64
    %v97 = vunpack.c.l.b16 %v65
    %v98 = vunpack.c.h.b16 %v65
    %v99 = vunpack.c.l.b16 %v66
    %v100 = vunpack.c.h.b16 %v66
    %v101 = vpack.c.b16 %v97, %v93
    %v102 = vpack.c.b16 %v98, %v94
    %v103 = vpack.c.b16 %v99, %v95
    %v104 = vpack.c.b16 %v100, %v96
    %vm109 = vcmask 130048
    %v111 = vsel %vm109, %v62, 0
    %113 = vmatprep.subr.bf16.mxu0 %v102
    %114 = vmatpush1.bf16.msra.mxu0 %v101
    %115 = vmatprep.subr.bf16.mxu0 0
    %116 = vmatpush1.bf16.msra.mxu0 0
    %117 = vmatprep.subr.bf16.mxu0 0
    %118 = vmatpush1.bf16.msra.mxu0 0
    %119 = vmatprep.subr.bf16.mxu0 0
    %120 = vmatpush1.bf16.msra.mxu0 0
    %121 = vmatprep.subr.bf16.mxu0 0
    %122 = vmatpush1.bf16.msra.mxu0 0
    %123 = vmatprep.subr.bf16.mxu0 0
    %124 = vmatpush1.bf16.msra.mxu0 0
    %125 = vmatprep.subr.bf16.mxu0 0
    %126 = vmatpush1.bf16.msra.mxu0 0
    %127 = vmatprep.subr.bf16.mxu0 0
    %128 = vmatpush1.bf16.msra.mxu0 0
    %129 = vmatprep.subr.bf16.mxu0 0
    %130 = vmatpush1.bf16.msra.mxu0 0
    %131 = vmatprep.subr.bf16.mxu0 0
    %132 = vmatpush1.bf16.msra.mxu0 0
    %133 = vmatprep.subr.bf16.mxu0 0
    %134 = vmatpush1.bf16.msra.mxu0 0
    %135 = vmatprep.subr.bf16.mxu0 0
    %136 = vmatpush1.bf16.msra.mxu0 0
    %137 = vmatprep.subr.bf16.mxu0 0
    %138 = vmatpush1.bf16.msra.mxu0 0
    %139 = vmatprep.subr.bf16.mxu0 0
    %140 = vmatpush1.bf16.msra.mxu0 0
    %141 = vmatprep.subr.bf16.mxu0 0
    %142 = vmatpush1.bf16.msra.mxu0 0
    %143 = vmatprep.subr.bf16.mxu0 0
    %144 = vmatpush1.bf16.msra.mxu0 0
    %145 = vmatprep.mubr.bf16.mxu0 0
    %146 = vmatmul.mubr.bf16.gmra.mrb[0].mxu0 %v111
    %v147 = vpop.f32.mrb[0].mxu0
    %v148 = vadd.f32 %v72, %v147
    %v149 = vpop.f32.mrb[0].mxu0
    %v150 = vadd.f32 %v76, %v149
    %v151 = vpop.f32.mrb[0].mxu0
    %v152 = vpop.f32.mrb[0].mxu0
    %153 = vdwg.mxu0
    %154 = vmatprep.subr.bf16.mxu0 %v104
    %155 = vmatpush1.bf16.msra.mxu0 %v103
    %156 = vmatprep.subr.bf16.mxu0 0
    %157 = vmatpush1.bf16.msra.mxu0 0
    %158 = vmatprep.subr.bf16.mxu0 0
    %159 = vmatpush1.bf16.msra.mxu0 0
    %160 = vmatprep.subr.bf16.mxu0 0
    %161 = vmatpush1.bf16.msra.mxu0 0
    %162 = vmatprep.subr.bf16.mxu0 0
    %163 = vmatpush1.bf16.msra.mxu0 0
    %164 = vmatprep.subr.bf16.mxu0 0
    %165 = vmatpush1.bf16.msra.mxu0 0
    %166 = vmatprep.subr.bf16.mxu0 0
    %167 = vmatpush1.bf16.msra.mxu0 0
    %168 = vmatprep.subr.bf16.mxu0 0
    %169 = vmatpush1.bf16.msra.mxu0 0
    %170 = vmatprep.subr.bf16.mxu0 0
    %171 = vmatpush1.bf16.msra.mxu0 0
    %172 = vmatprep.subr.bf16.mxu0 0
    %173 = vmatpush1.bf16.msra.mxu0 0
    %174 = vmatprep.subr.bf16.mxu0 0
    %175 = vmatpush1.bf16.msra.mxu0 0
    %176 = vmatprep.subr.bf16.mxu0 0
    %177 = vmatpush1.bf16.msra.mxu0 0
    %178 = vmatprep.subr.bf16.mxu0 0
    %179 = vmatpush1.bf16.msra.mxu0 0
    %180 = vmatprep.subr.bf16.mxu0 0
    %181 = vmatpush1.bf16.msra.mxu0 0
    %182 = vmatprep.subr.bf16.mxu0 0
    %183 = vmatpush1.bf16.msra.mxu0 0
    %184 = vmatprep.subr.bf16.mxu0 0
    %185 = vmatpush1.bf16.msra.mxu0 0
    %186 = vmatprep.mubr.bf16.mxu0 0
    %187 = vmatmul.mubr.bf16.gmra.mrb[0].mxu0 %v111
    %v188 = vpop.f32.mrb[0].mxu0
    %v189 = vadd.f32 %v80, %v188
    %v190 = vpop.f32.mrb[0].mxu0
    %v191 = vadd.f32 %v84, %v190
    %v192 = vpop.f32.mrb[0].mxu0
    %v193 = vpop.f32.mrb[0].mxu0
    %194 = vdwg.mxu0
    %v195 = vmax.f32 %v148, 0.0
    %v196 = vmax.f32 %v150, 0.0
    %v197 = vmax.f32 %v189, 0.0
    %v198 = vmax.f32 %v191, 0.0
    %v199 = vpack.c.bf16 %v195, %v195
    %v200 = vpack.c.bf16 %v196, %v196
    %v201 = vpack.c.bf16 %v197, %v197
    %v202 = vpack.c.bf16 %v198, %v198
    %v203 = vld [vmem:[#allocation5] sm:$0xff]
    %v204 = vld [vmem:[#allocation5 + $0x8] sm:$0xf]
    %v205 = vld [vmem:[#allocation5 + $0xc] sm:$0xff]
    %v206 = vld [vmem:[#allocation5 + $0x14] sm:$0xf]
    %v207 = vld [vmem:[#allocation5 + $0x18] sm:$0xff]
    %v208 = vld [vmem:[#allocation5 + $0x20] sm:$0xf]
    %v209 = vld [vmem:[#allocation5 + $0x24] sm:$0xff]
    %v210 = vld [vmem:[#allocation5 + $0x2c] sm:$0xf]
    %v211 = vld [vmem:[#allocation5 + $0x30] sm:$0xff]
    %v212 = vld [vmem:[#allocation5 + $0x38] sm:$0xf]
    %v213 = vld [vmem:[#allocation5 + $0x3c] sm:$0xff]
    %v214 = vld [vmem:[#allocation5 + $0x44] sm:$0xf]
    %v215 = vld [vmem:[#allocation5 + $0x48] sm:$0xff]
    %v216 = vld [vmem:[#allocation5 + $0x50] sm:$0xf]
    %v217 = vld [vmem:[#allocation5 + $0x54] sm:$0xff]
    %v218 = vld [vmem:[#allocation5 + $0x5c] sm:$0xf]
    %v219 = vld [vmem:[#allocation5 + $0x60] sm:$0xff]
    %v220 = vld [vmem:[#allocation5 + $0x68] sm:$0xf]
    %v221 = vld [vmem:[#allocation5 + $0x6c] sm:$0xff]
    %v222 = vld [vmem:[#allocation5 + $0x74] sm:$0xf]
    %v223 = vld [vmem:[#allocation5 + $0x78] sm:$0xff]
    %v224 = vld [vmem:[#allocation5 + $0x80] sm:$0xf]
    %v225 = vld [vmem:[#allocation5 + $0x84] sm:$0xff]
    %v226 = vld [vmem:[#allocation5 + $0x8c] sm:$0xf]
    %v227 = vld [vmem:[#allocation5 + $0x90] sm:$0xff]
    %v228 = vld [vmem:[#allocation5 + $0x98] sm:$0xf]
    %v229 = vld [vmem:[#allocation5 + $0x9c] sm:$0xff]
    %v230 = vld [vmem:[#allocation5 + $0xa4] sm:$0xf]
    %v231 = vld [vmem:[#allocation5 + $0xa8] sm:$0xff]
    %v232 = vld [vmem:[#allocation5 + $0xb0] sm:$0xf]
    %v233 = vld [vmem:[#allocation5 + $0xb4] sm:$0xff]
    %v234 = vld [vmem:[#allocation5 + $0xbc] sm:$0xf]
    %v235 = vld [vmem:[#allocation5 + $0xc0] sm:$0xff]
    %v236 = vld [vmem:[#allocation5 + $0xc8] sm:$0xf]
    %v237 = vld [vmem:[#allocation5 + $0xcc] sm:$0xff]
    %v238 = vld [vmem:[#allocation5 + $0xd4] sm:$0xf]
    %v239 = vld [vmem:[#allocation5 + $0xd8] sm:$0xff]
    %v240 = vld [vmem:[#allocation5 + $0xe0] sm:$0xf]
    %v241 = vld [vmem:[#allocation5 + $0xe4] sm:$0xff]
    %v242 = vld [vmem:[#allocation5 + $0xec] sm:$0xf]
    %v243 = vld [vmem:[#allocation5 + $0xf0] sm:$0xff]
    %v244 = vld [vmem:[#allocation5 + $0xf8] sm:$0xf]
    %v245 = vld [vmem:[#allocation5 + $0xfc] sm:$0xff]
    %v246 = vld [vmem:[#allocation5 + $0x104] sm:$0xf]
    %v247 = vld [vmem:[#allocation5 + $0x108] sm:$0xff]
    %v248 = vld [vmem:[#allocation5 + $0x110] sm:$0xf]
    %v249 = vld [vmem:[#allocation5 + $0x114] sm:$0xff]
    %v250 = vld [vmem:[#allocation5 + $0x11c] sm:$0xf]
    %v251 = vld [vmem:[#allocation5 + $0x120] sm:$0xff]
    %v252 = vld [vmem:[#allocation5 + $0x128] sm:$0xf]
    %v253 = vld [vmem:[#allocation5 + $0x12c] sm:$0xff]
    %v254 = vld [vmem:[#allocation5 + $0x134] sm:$0xf]
    %v255 = vld [vmem:[#allocation5 + $0x138] sm:$0xff]
    %v256 = vld [vmem:[#allocation5 + $0x140] sm:$0xf]
    %v257 = vld [vmem:[#allocation5 + $0x144] sm:$0xff]
    %v258 = vld [vmem:[#allocation5 + $0x14c] sm:$0xf]
    %v259 = vld [vmem:[#allocation5 + $0x150] sm:$0xff]
    %v260 = vld [vmem:[#allocation5 + $0x158] sm:$0xf]
    %v261 = vld [vmem:[#allocation5 + $0x15c] sm:$0xff]
    %v262 = vld [vmem:[#allocation5 + $0x164] sm:$0xf]
    %v263 = vld [vmem:[#allocation5 + $0x168] sm:$0xff]
    %v264 = vld [vmem:[#allocation5 + $0x170] sm:$0xf]
    %v265 = vld [vmem:[#allocation5 + $0x174] sm:$0xff]
    %v266 = vld [vmem:[#allocation5 + $0x17c] sm:$0xf]
    %v267 = vld [vmem:[#allocation5 + $0x180] sm:$0xff]
    %v268 = vld [vmem:[#allocation5 + $0x188] sm:$0xf]
    %v269 = vld [vmem:[#allocation5 + $0x18c] sm:$0xff]
    %v270 = vld [vmem:[#allocation5 + $0x194] sm:$0xf]
    %v271 = vld [vmem:[#allocation5 + $0x198] sm:$0xff]
    %v272 = vld [vmem:[#allocation5 + $0x1a0] sm:$0xf]
    %v273 = vld [vmem:[#allocation5 + $0x1a4] sm:$0xff]
    %v274 = vld [vmem:[#allocation5 + $0x1ac] sm:$0xf]
    %v275 = vld [vmem:[#allocation5 + $0x1b0] sm:$0xff]
    %v276 = vld [vmem:[#allocation5 + $0x1b8] sm:$0xf]
    %v277 = vld [vmem:[#allocation5 + $0x1bc] sm:$0xff]
    %v278 = vld [vmem:[#allocation5 + $0x1c4] sm:$0xf]
    %v279 = vld [vmem:[#allocation5 + $0x1c8] sm:$0xff]
    %v280 = vld [vmem:[#allocation5 + $0x1d0] sm:$0xf]
    %v281 = vld [vmem:[#allocation5 + $0x1d4] sm:$0xff]
    %v282 = vld [vmem:[#allocation5 + $0x1dc] sm:$0xf]
    %v283 = vld [vmem:[#allocation5 + $0x1e0] sm:$0xff]
    %v284 = vld [vmem:[#allocation5 + $0x1e8] sm:$0xf]
    %v285 = vld [vmem:[#allocation5 + $0x1ec] sm:$0xff]
    %v286 = vld [vmem:[#allocation5 + $0x1f4] sm:$0xf]
    %v287 = vld [vmem:[#allocation5 + $0x1f8] sm:$0xff]
    %v288 = vld [vmem:[#allocation5 + $0x200] sm:$0xf]
    %v289 = vld [vmem:[#allocation5 + $0x204] sm:$0xff]
    %v290 = vld [vmem:[#allocation5 + $0x20c] sm:$0xf]
    %v291 = vld [vmem:[#allocation5 + $0x210] sm:$0xff]
    %v292 = vld [vmem:[#allocation5 + $0x218] sm:$0xf]
    %v293 = vld [vmem:[#allocation5 + $0x21c] sm:$0xff]
    %v294 = vld [vmem:[#allocation5 + $0x224] sm:$0xf]
    %v295 = vld [vmem:[#allocation5 + $0x228] sm:$0xff]
    %v296 = vld [vmem:[#allocation5 + $0x230] sm:$0xf]
    %v297 = vld [vmem:[#allocation5 + $0x234] sm:$0xff]
    %v298 = vld [vmem:[#allocation5 + $0x23c] sm:$0xf]
    %v299 = vld [vmem:[#allocation5 + $0x240] sm:$0xff]
    %v300 = vld [vmem:[#allocation5 + $0x248] sm:$0xf]
    %v301 = vld [vmem:[#allocation5 + $0x24c] sm:$0xff]
    %v302 = vld [vmem:[#allocation5 + $0x254] sm:$0xf]
    %v303 = vld [vmem:[#allocation5 + $0x258] sm:$0xff]
    %v304 = vld [vmem:[#allocation5 + $0x260] sm:$0xf]
    %v305 = vld [vmem:[#allocation5 + $0x264] sm:$0xff]
    %v306 = vld [vmem:[#allocation5 + $0x26c] sm:$0xf]
    %v307 = vld [vmem:[#allocation5 + $0x270] sm:$0xff]
    %v308 = vld [vmem:[#allocation5 + $0x278] sm:$0xf]
    %v309 = vld [vmem:[#allocation5 + $0x27c] sm:$0xff]
    %v310 = vld [vmem:[#allocation5 + $0x284] sm:$0xf]
    %v311 = vld [vmem:[#allocation5 + $0x288] sm:$0xff]
    %v312 = vld [vmem:[#allocation5 + $0x290] sm:$0xf]
    %v313 = vld [vmem:[#allocation5 + $0x294] sm:$0xff]
    %v314 = vld [vmem:[#allocation5 + $0x29c] sm:$0xf]
    %v315 = vld [vmem:[#allocation5 + $0x2a0] sm:$0xff]
    %v316 = vld [vmem:[#allocation5 + $0x2a8] sm:$0xf]
    %v317 = vld [vmem:[#allocation5 + $0x2ac] sm:$0xff]
    %v318 = vld [vmem:[#allocation5 + $0x2b4] sm:$0xf]
    %v319 = vld [vmem:[#allocation5 + $0x2b8] sm:$0xff]
    %v320 = vld [vmem:[#allocation5 + $0x2c0] sm:$0xf]
    %v321 = vld [vmem:[#allocation5 + $0x2c4] sm:$0xff]
    %v322 = vld [vmem:[#allocation5 + $0x2cc] sm:$0xf]
    %v323 = vld [vmem:[#allocation5 + $0x2d0] sm:$0xff]
    %v324 = vld [vmem:[#allocation5 + $0x2d8] sm:$0xf]
    %v325 = vld [vmem:[#allocation5 + $0x2dc] sm:$0xff]
    %v326 = vld [vmem:[#allocation5 + $0x2e4] sm:$0xf]
    %v327 = vld [vmem:[#allocation5 + $0x2e8] sm:$0xff]
    %v328 = vld [vmem:[#allocation5 + $0x2f0] sm:$0xf]
    %v329 = vld [vmem:[#allocation5 + $0x2f4] sm:$0xff]
    %v330 = vld [vmem:[#allocation5 + $0x2fc] sm:$0xf]
    %v331 = vld [vmem:[%s1] sm:$0xf]
    %v332 = vld [vmem:[%s5] sm:$0x3f]
    %v334 = vcombine.high %v332, %v332
    %v336 = vunpack.c.l.s4 1983009808
    %v337 = vunpack.c.0.s8 %v336
    %v338 = vlaneseq
    %v339 = vshrl.u32 %v338, 7
    %v340 = vsub.s32 %v337, %v339
    %v341 = vrot.slane %v332, %v340
    %v343 = vunpack.c.l.s4 1983009808
    %v344 = vunpack.c.0.s8 %v343
    %v345 = vlaneseq
    %v346 = vshrl.u32 %v345, 7
    %v347 = vsub.s32 %v344, %v346
    %v348 = vrot.slane %v334, %v347
    %v349 = vcombine.high %v341, %v341
    %vm350 = vcmask 31744
    %v352 = vsel %vm350, %v331, 0
    %vm354 = vcmask 1041408
    %v356 = vsel %vm354, %v341, 0
    %v359 = vsel %vm354, %v349, 0
    %v362 = vsel %vm354, %v348, 0
    %364 = vmatprep.subr.bf16.mxu0 %v359
    %365 = vmatpush1.bf16.msra.mxu0 %v356
    %366 = vmatprep.subr.bf16.mxu0 0
    %367 = vmatpush1.bf16.msra.mxu0 0
    %368 = vmatprep.subr.bf16.mxu0 0
    %369 = vmatpush1.bf16.msra.mxu0 0
    %370 = vmatprep.subr.bf16.mxu0 0
    %371 = vmatpush1.bf16.msra.mxu0 0
    %372 = vmatprep.subr.bf16.mxu0 0
    %373 = vmatpush1.bf16.msra.mxu0 0
    %374 = vmatprep.subr.bf16.mxu0 0
    %375 = vmatpush1.bf16.msra.mxu0 0
    %376 = vmatprep.subr.bf16.mxu0 0
    %377 = vmatpush1.bf16.msra.mxu0 0
    %378 = vmatprep.subr.bf16.mxu0 0
    %379 = vmatpush1.bf16.msra.mxu0 0
    %380 = vmatprep.subr.bf16.mxu0 0
    %381 = vmatpush1.bf16.msra.mxu0 0
    %382 = vmatprep.subr.bf16.mxu0 0
    %383 = vmatpush1.bf16.msra.mxu0 0
    %384 = vmatprep.subr.bf16.mxu0 0
    %385 = vmatpush1.bf16.msra.mxu0 0
    %386 = vmatprep.subr.bf16.mxu0 0
    %387 = vmatpush1.bf16.msra.mxu0 0
    %388 = vmatprep.subr.bf16.mxu0 0
    %389 = vmatpush1.bf16.msra.mxu0 0
    %390 = vmatprep.subr.bf16.mxu0 0
    %391 = vmatpush1.bf16.msra.mxu0 0
    %392 = vmatprep.subr.bf16.mxu0 0
    %393 = vmatpush1.bf16.msra.mxu0 0
    %394 = vmatprep.subr.bf16.mxu0 0
    %395 = vmatpush1.bf16.msra.mxu0 0
    %396 = vmatprep.mubr.bf16.mxu0 0
    %397 = vmatmul.mubr.bf16.gmra.mrb[0].mxu0 %v352
    %v398 = vpop.f32.mrb[0].mxu0
    %v399 = vadd.f32 0.0, %v398
    %v400 = vpop.f32.mrb[0].mxu0
    %v401 = vadd.f32 0.0, %v400
    %v402 = vpop.f32.mrb[0].mxu0
    %v403 = vpop.f32.mrb[0].mxu0
    %404 = vdwg.mxu0
    %405 = vmatprep.subr.bf16.mxu0 0
    %406 = vmatpush1.bf16.msra.mxu0 %v362
    %407 = vmatprep.subr.bf16.mxu0 0
    %408 = vmatpush1.bf16.msra.mxu0 0
    %409 = vmatprep.subr.bf16.mxu0 0
    %410 = vmatpush1.bf16.msra.mxu0 0
    %411 = vmatprep.subr.bf16.mxu0 0
    %412 = vmatpush1.bf16.msra.mxu0 0
    %413 = vmatprep.subr.bf16.mxu0 0
    %414 = vmatpush1.bf16.msra.mxu0 0
    %415 = vmatprep.subr.bf16.mxu0 0
    %416 = vmatpush1.bf16.msra.mxu0 0
    %417 = vmatprep.subr.bf16.mxu0 0
    %418 = vmatpush1.bf16.msra.mxu0 0
    %419 = vmatprep.subr.bf16.mxu0 0
    %420 = vmatpush1.bf16.msra.mxu0 0
    %421 = vmatprep.subr.bf16.mxu0 0
    %422 = vmatpush1.bf16.msra.mxu0 0
    %423 = vmatprep.subr.bf16.mxu0 0
    %424 = vmatpush1.bf16.msra.mxu0 0
    %425 = vmatprep.subr.bf16.mxu0 0
    %426 = vmatpush1.bf16.msra.mxu0 0
    %427 = vmatprep.subr.bf16.mxu0 0
    %428 = vmatpush1.bf16.msra.mxu0 0
    %429 = vmatprep.subr.bf16.mxu0 0
    %430 = vmatpush1.bf16.msra.mxu0 0
    %431 = vmatprep.subr.bf16.mxu0 0
    %432 = vmatpush1.bf16.msra.mxu0 0
    %433 = vmatprep.subr.bf16.mxu0 0
    %434 = vmatpush1.bf16.msra.mxu0 0
    %435 = vmatprep.subr.bf16.mxu0 0
    %436 = vmatpush1.bf16.msra.mxu0 0
    %437 = vmatprep.mubr.bf16.mxu0 0
    %438 = vmatmul.mubr.bf16.gmra.mrb[0].mxu0 %v352
    %v439 = vpop.f32.mrb[0].mxu0
    %v440 = vadd.f32 0.0, %v439
    %v441 = vpop.f32.mrb[0].mxu0
    %v442 = vpop.f32.mrb[0].mxu0
    %v443 = vpop.f32.mrb[0].mxu0
    %444 = vdwg.mxu0
    %v573 = vunpack.c.l.b16 %v203
    %v574 = vunpack.c.h.b16 %v203
    %v575 = vunpack.c.l.b16 %v204
    %v576 = vunpack.c.l.b16 %v205
    %v577 = vunpack.c.h.b16 %v205
    %v578 = vunpack.c.l.b16 %v206
    %v579 = vunpack.c.l.b16 %v207
    %v580 = vunpack.c.h.b16 %v207
    %v581 = vunpack.c.l.b16 %v208
    %v582 = vunpack.c.l.b16 %v209
    %v583 = vunpack.c.h.b16 %v209
    %v584 = vunpack.c.l.b16 %v210
    %v585 = vunpack.c.l.b16 %v211
    %v586 = vunpack.c.h.b16 %v211
    %v587 = vunpack.c.l.b16 %v212
    %v588 = vunpack.c.l.b16 %v213
    %v589 = vunpack.c.h.b16 %v213
    %v590 = vunpack.c.l.b16 %v214
    %v591 = vunpack.c.l.b16 %v215
    %v592 = vunpack.c.h.b16 %v215
    %v593 = vunpack.c.l.b16 %v216
    %v594 = vunpack.c.l.b16 %v217
    %v595 = vunpack.c.h.b16 %v217
    %v596 = vunpack.c.l.b16 %v218
    %v597 = vunpack.c.l.b16 %v219
    %v598 = vunpack.c.h.b16 %v219
    %v599 = vunpack.c.l.b16 %v220
    %v600 = vunpack.c.l.b16 %v221
    %v601 = vunpack.c.h.b16 %v221
    %v602 = vunpack.c.l.b16 %v222
    %v603 = vunpack.c.l.b16 %v223
    %v604 = vunpack.c.h.b16 %v223
    %v605 = vunpack.c.l.b16 %v224
    %v606 = vunpack.c.l.b16 %v225
    %v607 = vunpack.c.h.b16 %v225
    %v608 = vunpack.c.l.b16 %v226
    %v609 = vunpack.c.l.b16 %v227
    %v610 = vunpack.c.h.b16 %v227
    %v611 = vunpack.c.l.b16 %v228
    %v612 = vunpack.c.l.b16 %v229
    %v613 = vunpack.c.h.b16 %v229
    %v614 = vunpack.c.l.b16 %v230
    %v615 = vunpack.c.l.b16 %v231
    %v616 = vunpack.c.h.b16 %v231
    %v617 = vunpack.c.l.b16 %v232
    %v618 = vunpack.c.l.b16 %v233
    %v619 = vunpack.c.h.b16 %v233
    %v620 = vunpack.c.l.b16 %v234
    %v621 = vunpack.c.l.b16 %v235
    %v622 = vunpack.c.h.b16 %v235
    %v623 = vunpack.c.l.b16 %v236
    %v624 = vunpack.c.l.b16 %v237
    %v625 = vunpack.c.h.b16 %v237
    %v626 = vunpack.c.l.b16 %v238
    %v627 = vunpack.c.l.b16 %v239
    %v628 = vunpack.c.h.b16 %v239
    %v629 = vunpack.c.l.b16 %v240
    %v630 = vunpack.c.l.b16 %v241
    %v631 = vunpack.c.h.b16 %v241
    %v632 = vunpack.c.l.b16 %v242
    %v633 = vunpack.c.l.b16 %v243
    %v634 = vunpack.c.h.b16 %v243
    %v635 = vunpack.c.l.b16 %v244
    %v636 = vunpack.c.l.b16 %v245
    %v637 = vunpack.c.h.b16 %v245
    %v638 = vunpack.c.l.b16 %v246
    %v639 = vunpack.c.l.b16 %v247
    %v640 = vunpack.c.h.b16 %v247
    %v641 = vunpack.c.l.b16 %v248
    %v642 = vunpack.c.l.b16 %v249
    %v643 = vunpack.c.h.b16 %v249
    %v644 = vunpack.c.l.b16 %v250
    %v645 = vunpack.c.l.b16 %v251
    %v646 = vunpack.c.h.b16 %v251
    %v647 = vunpack.c.l.b16 %v252
    %v648 = vunpack.c.l.b16 %v253
    %v649 = vunpack.c.h.b16 %v253
    %v650 = vunpack.c.l.b16 %v254
    %v651 = vunpack.c.l.b16 %v255
    %v652 = vunpack.c.h.b16 %v255
    %v653 = vunpack.c.l.b16 %v256
    %v654 = vunpack.c.l.b16 %v257
    %v655 = vunpack.c.h.b16 %v257
    %v656 = vunpack.c.l.b16 %v258
    %v657 = vunpack.c.l.b16 %v259
    %v658 = vunpack.c.h.b16 %v259
    %v659 = vunpack.c.l.b16 %v260
    %v660 = vunpack.c.l.b16 %v261
    %v661 = vunpack.c.h.b16 %v261
    %v662 = vunpack.c.l.b16 %v262
    %v663 = vunpack.c.l.b16 %v263
    %v664 = vunpack.c.h.b16 %v263
    %v665 = vunpack.c.l.b16 %v264
    %v666 = vunpack.c.l.b16 %v265
    %v667 = vunpack.c.h.b16 %v265
    %v668 = vunpack.c.l.b16 %v266
    %v669 = vunpack.c.l.b16 %v267
    %v670 = vunpack.c.h.b16 %v267
    %v671 = vunpack.c.l.b16 %v268
    %v672 = vunpack.c.l.b16 %v269
    %v673 = vunpack.c.h.b16 %v269
    %v674 = vunpack.c.l.b16 %v270
    %v675 = vunpack.c.l.b16 %v271
    %v676 = vunpack.c.h.b16 %v271
    %v677 = vunpack.c.l.b16 %v272
    %v678 = vunpack.c.l.b16 %v273
    %v679 = vunpack.c.h.b16 %v273
    %v680 = vunpack.c.l.b16 %v274
    %v681 = vunpack.c.l.b16 %v275
    %v682 = vunpack.c.h.b16 %v275
    %v683 = vunpack.c.l.b16 %v276
    %v684 = vunpack.c.l.b16 %v277
    %v685 = vunpack.c.h.b16 %v277
    %v686 = vunpack.c.l.b16 %v278
    %v687 = vunpack.c.l.b16 %v279
    %v688 = vunpack.c.h.b16 %v279
    %v689 = vunpack.c.l.b16 %v280
    %v690 = vunpack.c.l.b16 %v281
    %v691 = vunpack.c.h.b16 %v281
    %v692 = vunpack.c.l.b16 %v282
    %v693 = vunpack.c.l.b16 %v283
    %v694 = vunpack.c.h.b16 %v283
    %v695 = vunpack.c.l.b16 %v284
    %v696 = vunpack.c.l.b16 %v285
    %v697 = vunpack.c.h.b16 %v285
    %v698 = vunpack.c.l.b16 %v286
    %v699 = vunpack.c.l.b16 %v287
    %v700 = vunpack.c.h.b16 %v287
    %v701 = vunpack.c.l.b16 %v288
    %v702 = vunpack.c.l.b16 %v289
    %v703 = vunpack.c.h.b16 %v289
    %v704 = vunpack.c.l.b16 %v290
    %v705 = vunpack.c.l.b16 %v291
    %v706 = vunpack.c.h.b16 %v291
    %v707 = vunpack.c.l.b16 %v292
    %v708 = vunpack.c.l.b16 %v293
    %v709 = vunpack.c.h.b16 %v293
    %v710 = vunpack.c.l.b16 %v294
    %v711 = vunpack.c.l.b16 %v295
    %v712 = vunpack.c.h.b16 %v295
    %v713 = vunpack.c.l.b16 %v296
    %v714 = vunpack.c.l.b16 %v297
    %v715 = vunpack.c.h.b16 %v297
    %v716 = vunpack.c.l.b16 %v298
    %v717 = vunpack.c.l.b16 %v299
    %v718 = vunpack.c.h.b16 %v299
    %v719 = vunpack.c.l.b16 %v300
    %v720 = vunpack.c.l.b16 %v301
    %v721 = vunpack.c.h.b16 %v301
    %v722 = vunpack.c.l.b16 %v302
    %v723 = vunpack.c.l.b16 %v303
    %v724 = vunpack.c.h.b16 %v303
    %v725 = vunpack.c.l.b16 %v304
    %v726 = vunpack.c.l.b16 %v305
    %v727 = vunpack.c.h.b16 %v305
    %v728 = vunpack.c.l.b16 %v306
    %v729 = vunpack.c.l.b16 %v307
    %v730 = vunpack.c.h.b16 %v307
    %v731 = vunpack.c.l.b16 %v308
    %v732 = vunpack.c.l.b16 %v309
    %v733 = vunpack.c.h.b16 %v309
    %v734 = vunpack.c.l.b16 %v310
    %v735 = vunpack.c.l.b16 %v311
    %v736 = vunpack.c.h.b16 %v311
    %v737 = vunpack.c.l.b16 %v312
    %v738 = vunpack.c.l.b16 %v313
    %v739 = vunpack.c.h.b16 %v313
    %v740 = vunpack.c.l.b16 %v314
    %v741 = vunpack.c.l.b16 %v315
    %v742 = vunpack.c.h.b16 %v315
    %v743 = vunpack.c.l.b16 %v316
    %v744 = vunpack.c.l.b16 %v317
    %v745 = vunpack.c.h.b16 %v317
    %v746 = vunpack.c.l.b16 %v318
    %v747 = vunpack.c.l.b16 %v319
    %v748 = vunpack.c.h.b16 %v319
    %v749 = vunpack.c.l.b16 %v320
    %v750 = vunpack.c.l.b16 %v321
    %v751 = vunpack.c.h.b16 %v321
    %v752 = vunpack.c.l.b16 %v322
    %v753 = vunpack.c.l.b16 %v323
    %v754 = vunpack.c.h.b16 %v323
    %v755 = vunpack.c.l.b16 %v324
    %v756 = vunpack.c.l.b16 %v325
    %v757 = vunpack.c.h.b16 %v325
    %v758 = vunpack.c.l.b16 %v326
    %v759 = vunpack.c.l.b16 %v327
    %v760 = vunpack.c.h.b16 %v327
    %v761 = vunpack.c.l.b16 %v328
    %v762 = vunpack.c.l.b16 %v329
    %v763 = vunpack.c.h.b16 %v329
    %v764 = vunpack.c.l.b16 %v330
    %v765 = vpack.c.b16 %v576, %v573
    %v766 = vpack.c.b16 %v577, %v574
    %v767 = vpack.c.b16 %v578, %v575
    %v768 = vpack.c.b16 %v582, %v579
    %v769 = vpack.c.b16 %v583, %v580
    %v770 = vpack.c.b16 %v584, %v581
    %v771 = vpack.c.b16 %v588, %v585
    %v772 = vpack.c.b16 %v589, %v586
    %v773 = vpack.c.b16 %v590, %v587
    %v774 = vpack.c.b16 %v594, %v591
    %v775 = vpack.c.b16 %v595, %v592
    %v776 = vpack.c.b16 %v596, %v593
    %v777 = vpack.c.b16 %v600, %v597
    %v778 = vpack.c.b16 %v601, %v598
    %v779 = vpack.c.b16 %v602, %v599
    %v780 = vpack.c.b16 %v606, %v603
    %v781 = vpack.c.b16 %v607, %v604
    %v782 = vpack.c.b16 %v608, %v605
    %v783 = vpack.c.b16 %v612, %v609
    %v784 = vpack.c.b16 %v613, %v610
    %v785 = vpack.c.b16 %v614, %v611
    %v786 = vpack.c.b16 %v618, %v615
    %v787 = vpack.c.b16 %v619, %v616
    %v788 = vpack.c.b16 %v620, %v617
    %v789 = vpack.c.b16 %v624, %v621
    %v790 = vpack.c.b16 %v625, %v622
    %v791 = vpack.c.b16 %v626, %v623
    %v792 = vpack.c.b16 %v630, %v627
    %v793 = vpack.c.b16 %v631, %v628
    %v794 = vpack.c.b16 %v632, %v629
    %v795 = vpack.c.b16 %v636, %v633
    %v796 = vpack.c.b16 %v637, %v634
    %v797 = vpack.c.b16 %v638, %v635
    %v798 = vpack.c.b16 %v642, %v639
    %v799 = vpack.c.b16 %v643, %v640
    %v800 = vpack.c.b16 %v644, %v641
    %v801 = vpack.c.b16 %v648, %v645
    %v802 = vpack.c.b16 %v649, %v646
    %v803 = vpack.c.b16 %v650, %v647
    %v804 = vpack.c.b16 %v654, %v651
    %v805 = vpack.c.b16 %v655, %v652
    %v806 = vpack.c.b16 %v656, %v653
    %v807 = vpack.c.b16 %v660, %v657
    %v808 = vpack.c.b16 %v661, %v658
    %v809 = vpack.c.b16 %v662, %v659
    %v810 = vpack.c.b16 %v666, %v663
    %v811 = vpack.c.b16 %v667, %v664
    %v812 = vpack.c.b16 %v668, %v665
    %v813 = vpack.c.b16 %v672, %v669
    %v814 = vpack.c.b16 %v673, %v670
    %v815 = vpack.c.b16 %v674, %v671
    %v816 = vpack.c.b16 %v678, %v675
    %v817 = vpack.c.b16 %v679, %v676
    %v818 = vpack.c.b16 %v680, %v677
    %v819 = vpack.c.b16 %v684, %v681
    %v820 = vpack.c.b16 %v685, %v682
    %v821 = vpack.c.b16 %v686, %v683
    %v822 = vpack.c.b16 %v690, %v687
    %v823 = vpack.c.b16 %v691, %v688
    %v824 = vpack.c.b16 %v692, %v689
    %v825 = vpack.c.b16 %v696, %v693
    %v826 = vpack.c.b16 %v697, %v694
    %v827 = vpack.c.b16 %v698, %v695
    %v828 = vpack.c.b16 %v702, %v699
    %v829 = vpack.c.b16 %v703, %v700
    %v830 = vpack.c.b16 %v704, %v701
    %v831 = vpack.c.b16 %v708, %v705
    %v832 = vpack.c.b16 %v709, %v706
    %v833 = vpack.c.b16 %v710, %v707
    %v834 = vpack.c.b16 %v714, %v711
    %v835 = vpack.c.b16 %v715, %v712
    %v836 = vpack.c.b16 %v716, %v713
    %v837 = vpack.c.b16 %v720, %v717
    %v838 = vpack.c.b16 %v721, %v718
    %v839 = vpack.c.b16 %v722, %v719
    %v840 = vpack.c.b16 %v726, %v723
    %v841 = vpack.c.b16 %v727, %v724
    %v842 = vpack.c.b16 %v728, %v725
    %v843 = vpack.c.b16 %v732, %v729
    %v844 = vpack.c.b16 %v733, %v730
    %v845 = vpack.c.b16 %v734, %v731
    %v846 = vpack.c.b16 %v738, %v735
    %v847 = vpack.c.b16 %v739, %v736
    %v848 = vpack.c.b16 %v740, %v737
    %v849 = vpack.c.b16 %v744, %v741
    %v850 = vpack.c.b16 %v745, %v742
    %v851 = vpack.c.b16 %v746, %v743
    %v852 = vpack.c.b16 %v750, %v747
    %v853 = vpack.c.b16 %v751, %v748
    %v854 = vpack.c.b16 %v752, %v749
    %v855 = vpack.c.b16 %v756, %v753
    %v856 = vpack.c.b16 %v757, %v754
    %v857 = vpack.c.b16 %v758, %v755
    %v858 = vpack.c.b16 %v762, %v759
    %v859 = vpack.c.b16 %v763, %v760
    %v860 = vpack.c.b16 %v764, %v761
    %957 = vmatprep.subr.bf16.mxu0 %v766
    %958 = vmatpush1.bf16.msra.mxu0 %v765
    %959 = vmatprep.subr.bf16.mxu0 %v769
    %960 = vmatpush1.bf16.msra.mxu0 %v768
    %961 = vmatprep.subr.bf16.mxu0 %v772
    %962 = vmatpush1.bf16.msra.mxu0 %v771
    %963 = vmatprep.subr.bf16.mxu0 %v775
    %964 = vmatpush1.bf16.msra.mxu0 %v774
    %965 = vmatprep.subr.bf16.mxu0 %v778
    %966 = vmatpush1.bf16.msra.mxu0 %v777
    %967 = vmatprep.subr.bf16.mxu0 %v781
    %968 = vmatpush1.bf16.msra.mxu0 %v780
    %969 = vmatprep.subr.bf16.mxu0 %v784
    %970 = vmatpush1.bf16.msra.mxu0 %v783
    %971 = vmatprep.subr.bf16.mxu0 %v787
    %972 = vmatpush1.bf16.msra.mxu0 %v786
    %973 = vmatprep.subr.bf16.mxu0 %v790
    %974 = vmatpush1.bf16.msra.mxu0 %v789
    %975 = vmatprep.subr.bf16.mxu0 %v793
    %976 = vmatpush1.bf16.msra.mxu0 %v792
    %977 = vmatprep.subr.bf16.mxu0 %v796
    %978 = vmatpush1.bf16.msra.mxu0 %v795
    %979 = vmatprep.subr.bf16.mxu0 %v799
    %980 = vmatpush1.bf16.msra.mxu0 %v798
    %981 = vmatprep.subr.bf16.mxu0 %v802
    %982 = vmatpush1.bf16.msra.mxu0 %v801
    %983 = vmatprep.subr.bf16.mxu0 %v805
    %984 = vmatpush1.bf16.msra.mxu0 %v804
    %985 = vmatprep.subr.bf16.mxu0 %v808
    %986 = vmatpush1.bf16.msra.mxu0 %v807
    %987 = vmatprep.subr.bf16.mxu0 %v811
    %988 = vmatpush1.bf16.msra.mxu0 %v810
    %989 = vmatprep.mubr.bf16.mxu0 %v200
    %990 = vmatmul.mubr.bf16.gmra.mrb[0].mxu0 %v199
    %v991 = vpop.f32.mrb[0].mxu0
    %v992 = vadd.f32 %v399, %v991
    %v993 = vpop.f32.mrb[0].mxu0
    %v994 = vadd.f32 %v401, %v993
    %v995 = vpop.f32.mrb[0].mxu0
    %v996 = vpop.f32.mrb[0].mxu0
    %997 = vdwg.mxu0
    %998 = vmatprep.subr.bf16.mxu0 %v814
    %999 = vmatpush1.bf16.msra.mxu0 %v813
    %1000 = vmatprep.subr.bf16.mxu0 %v817
    %1001 = vmatpush1.bf16.msra.mxu0 %v816
    %1002 = vmatprep.subr.bf16.mxu0 %v820
    %1003 = vmatpush1.bf16.msra.mxu0 %v819
    %1004 = vmatprep.subr.bf16.mxu0 %v823
    %1005 = vmatpush1.bf16.msra.mxu0 %v822
    %1006 = vmatprep.subr.bf16.mxu0 %v826
    %1007 = vmatpush1.bf16.msra.mxu0 %v825
    %1008 = vmatprep.subr.bf16.mxu0 %v829
    %1009 = vmatpush1.bf16.msra.mxu0 %v828
    %1010 = vmatprep.subr.bf16.mxu0 %v832
    %1011 = vmatpush1.bf16.msra.mxu0 %v831
    %1012 = vmatprep.subr.bf16.mxu0 %v835
    %1013 = vmatpush1.bf16.msra.mxu0 %v834
    %1014 = vmatprep.subr.bf16.mxu0 %v838
    %1015 = vmatpush1.bf16.msra.mxu0 %v837
    %1016 = vmatprep.subr.bf16.mxu0 %v841
    %1017 = vmatpush1.bf16.msra.mxu0 %v840
    %1018 = vmatprep.subr.bf16.mxu0 %v844
    %1019 = vmatpush1.bf16.msra.mxu0 %v843
    %1020 = vmatprep.subr.bf16.mxu0 %v847
    %1021 = vmatpush1.bf16.msra.mxu0 %v846
    %1022 = vmatprep.subr.bf16.mxu0 %v850
    %1023 = vmatpush1.bf16.msra.mxu0 %v849
    %1024 = vmatprep.subr.bf16.mxu0 %v853
    %1025 = vmatpush1.bf16.msra.mxu0 %v852
    %1026 = vmatprep.subr.bf16.mxu0 %v856
    %1027 = vmatpush1.bf16.msra.mxu0 %v855
    %1028 = vmatprep.subr.bf16.mxu0 %v859
    %1029 = vmatpush1.bf16.msra.mxu0 %v858
    %1030 = vmatprep.mubr.bf16.mxu0 %v202
    %1031 = vmatmul.mubr.bf16.gmra.mrb[0].mxu0 %v201
    %v1032 = vpop.f32.mrb[0].mxu0
    %v1033 = vadd.f32 %v992, %v1032
    %v1034 = vpop.f32.mrb[0].mxu0
    %v1035 = vadd.f32 %v994, %v1034
    %v1036 = vpop.f32.mrb[0].mxu0
    %v1037 = vpop.f32.mrb[0].mxu0
    %1038 = vdwg.mxu0
    %1039 = vmatprep.subr.bf16.mxu0 0
    %1040 = vmatpush1.bf16.msra.mxu0 %v767
    %1041 = vmatprep.subr.bf16.mxu0 0
    %1042 = vmatpush1.bf16.msra.mxu0 %v770
    %1043 = vmatprep.subr.bf16.mxu0 0
    %1044 = vmatpush1.bf16.msra.mxu0 %v773
    %1045 = vmatprep.subr.bf16.mxu0 0
    %1046 = vmatpush1.bf16.msra.mxu0 %v776
    %1047 = vmatprep.subr.bf16.mxu0 0
    %1048 = vmatpush1.bf16.msra.mxu0 %v779
    %1049 = vmatprep.subr.bf16.mxu0 0
    %1050 = vmatpush1.bf16.msra.mxu0 %v782
    %1051 = vmatprep.subr.bf16.mxu0 0
    %1052 = vmatpush1.bf16.msra.mxu0 %v785
    %1053 = vmatprep.subr.bf16.mxu0 0
    %1054 = vmatpush1.bf16.msra.mxu0 %v788
    %1055 = vmatprep.subr.bf16.mxu0 0
    %1056 = vmatpush1.bf16.msra.mxu0 %v791
    %1057 = vmatprep.subr.bf16.mxu0 0
    %1058 = vmatpush1.bf16.msra.mxu0 %v794
    %1059 = vmatprep.subr.bf16.mxu0 0
    %1060 = vmatpush1.bf16.msra.mxu0 %v797
    %1061 = vmatprep.subr.bf16.mxu0 0
    %1062 = vmatpush1.bf16.msra.mxu0 %v800
    %1063 = vmatprep.subr.bf16.mxu0 0
    %1064 = vmatpush1.bf16.msra.mxu0 %v803
    %1065 = vmatprep.subr.bf16.mxu0 0
    %1066 = vmatpush1.bf16.msra.mxu0 %v806
    %1067 = vmatprep.subr.bf16.mxu0 0
    %1068 = vmatpush1.bf16.msra.mxu0 %v809
    %1069 = vmatprep.subr.bf16.mxu0 0
    %1070 = vmatpush1.bf16.msra.mxu0 %v812
    %1071 = vmatprep.mubr.bf16.mxu0 %v200
    %1072 = vmatmul.mubr.bf16.gmra.mrb[0].mxu0 %v199
    %v1073 = vpop.f32.mrb[0].mxu0
    %v1074 = vadd.f32 %v440, %v1073
    %v1075 = vpop.f32.mrb[0].mxu0
    %v1076 = vpop.f32.mrb[0].mxu0
    %v1077 = vpop.f32.mrb[0].mxu0
    %1078 = vdwg.mxu0
    %1079 = vmatprep.subr.bf16.mxu0 0
    %1080 = vmatpush1.bf16.msra.mxu0 %v815
    %1081 = vmatprep.subr.bf16.mxu0 0
    %1082 = vmatpush1.bf16.msra.mxu0 %v818
    %1083 = vmatprep.subr.bf16.mxu0 0
    %1084 = vmatpush1.bf16.msra.mxu0 %v821
    %1085 = vmatprep.subr.bf16.mxu0 0
    %1086 = vmatpush1.bf16.msra.mxu0 %v824
    %1087 = vmatprep.subr.bf16.mxu0 0
    %1088 = vmatpush1.bf16.msra.mxu0 %v827
    %1089 = vmatprep.subr.bf16.mxu0 0
    %1090 = vmatpush1.bf16.msra.mxu0 %v830
    %1091 = vmatprep.subr.bf16.mxu0 0
    %1092 = vmatpush1.bf16.msra.mxu0 %v833
    %1093 = vmatprep.subr.bf16.mxu0 0
    %1094 = vmatpush1.bf16.msra.mxu0 %v836
    %1095 = vmatprep.subr.bf16.mxu0 0
    %1096 = vmatpush1.bf16.msra.mxu0 %v839
    %1097 = vmatprep.subr.bf16.mxu0 0
    %1098 = vmatpush1.bf16.msra.mxu0 %v842
    %1099 = vmatprep.subr.bf16.mxu0 0
    %1100 = vmatpush1.bf16.msra.mxu0 %v845
    %1101 = vmatprep.subr.bf16.mxu0 0
    %1102 = vmatpush1.bf16.msra.mxu0 %v848
    %1103 = vmatprep.subr.bf16.mxu0 0
    %1104 = vmatpush1.bf16.msra.mxu0 %v851
    %1105 = vmatprep.subr.bf16.mxu0 0
    %1106 = vmatpush1.bf16.msra.mxu0 %v854
    %1107 = vmatprep.subr.bf16.mxu0 0
    %1108 = vmatpush1.bf16.msra.mxu0 %v857
    %1109 = vmatprep.subr.bf16.mxu0 0
    %1110 = vmatpush1.bf16.msra.mxu0 %v860
    %1111 = vmatprep.mubr.bf16.mxu0 %v202
    %1112 = vmatmul.mubr.bf16.gmra.mrb[0].mxu0 %v201
    %v1113 = vpop.f32.mrb[0].mxu0
    %v1114 = vadd.f32 %v1074, %v1113
    %v1115 = vpop.f32.mrb[0].mxu0
    %v1116 = vpop.f32.mrb[0].mxu0
    %v1117 = vpop.f32.mrb[0].mxu0
    %1118 = vdwg.mxu0
    %v1119 = vld [vmem:[%s6] sm:$0x7]
    %v1121 = vlaneseq
    %v1122 = vshrl.u32 %v1121, 7
    %v1123 = vsub.s32 0, %v1122
    %v1124 = vrot.slane %v1119, %v1123
    %v1125 = vlaneseq
    %v1126 = vshrl.u32 %v1125, 7
    %v1127 = vsub.s32 1, %v1126
    %v1128 = vrot.slane %v1119, %v1127
    %v1129 = vlaneseq
    %v1130 = vshrl.u32 %v1129, 7
    %v1131 = vsub.s32 2, %v1130
    %v1132 = vrot.slane %v1119, %v1131
    %v1136 = vadd.f32 %v1033, %v1124
    %v1137 = vadd.f32 %v1035, %v1128
    %v1138 = vadd.f32 %v1114, %v1132
    %v1139 = vmax.f32 %v1136, 0.0
    %v1140 = vmax.f32 %v1137, 0.0
    %v1141 = vmax.f32 %v1138, 0.0
    %v1142 = vld [vmem:[%s7] sm:$0xff]
    %v1143 = vld [vmem:[%s7 + $0x8] sm:$0xf]
    %v1144 = vpack.c.bf16 %v1139, %v1139
    %v1145 = vpack.c.bf16 %v1140, %v1140
    %v1146 = vpack.c.bf16 %v1141, %v1141
    %v1149 = vunpack.c.l.b16 %v1142
    %v1150 = vunpack.c.h.b16 %v1142
    %v1151 = vunpack.c.l.b16 %v1143
    %v1152 = vpack.c.b16 %v1149, %v1149
    %v1153 = vpack.c.b16 %v1150, %v1150
    %v1154 = vpack.c.b16 %v1151, %v1151
    %1158 = vmatprep.subr.bf16.mxu0 %v1145
    %1159 = vmatpush1.bf16.xpose.msra.mxu0 %v1144
    %1160 = vmatprep.subr.bf16.mxu0 0
    %1161 = vmatpush1.bf16.xpose.msra.mxu0 0
    %1162 = vmatprep.subr.bf16.mxu0 0
    %1163 = vmatpush1.bf16.xpose.msra.mxu0 0
    %1164 = vmatprep.subr.bf16.mxu0 0
    %1165 = vmatpush1.bf16.xpose.msra.mxu0 0
    %1166 = vmatprep.subr.bf16.mxu0 0
    %1167 = vmatpush1.bf16.xpose.msra.mxu0 0
    %1168 = vmatprep.subr.bf16.mxu0 0
    %1169 = vmatpush1.bf16.xpose.msra.mxu0 0
    %1170 = vmatprep.subr.bf16.mxu0 0
    %1171 = vmatpush1.bf16.xpose.msra.mxu0 0
    %1172 = vmatprep.subr.bf16.mxu0 0
    %1173 = vmatpush1.bf16.xpose.msra.mxu0 0
    %1174 = vmatprep.subr.bf16.mxu0 0
    %1175 = vmatpush1.bf16.xpose.msra.mxu0 0
    %1176 = vmatprep.subr.bf16.mxu0 0
    %1177 = vmatpush1.bf16.xpose.msra.mxu0 0
    %1178 = vmatprep.subr.bf16.mxu0 0
    %1179 = vmatpush1.bf16.xpose.msra.mxu0 0
    %1180 = vmatprep.subr.bf16.mxu0 0
    %1181 = vmatpush1.bf16.xpose.msra.mxu0 0
    %1182 = vmatprep.subr.bf16.mxu0 0
    %1183 = vmatpush1.bf16.xpose.msra.mxu0 0
    %1184 = vmatprep.subr.bf16.mxu0 0
    %1185 = vmatpush1.bf16.xpose.msra.mxu0 0
    %1186 = vmatprep.subr.bf16.mxu0 0
    %1187 = vmatpush1.bf16.xpose.msra.mxu0 0
    %1188 = vmatprep.subr.bf16.mxu0 0
    %1189 = vmatpush1.bf16.xpose.msra.mxu0 0
    %1190 = vmatprep.mubr.bf16.mxu0 %v1153
    %1191 = vmatmul.mubr.bf16.gmra.mrb[0].mxu0 %v1152
    %v1192 = vpop.f32.mrb[0].mxu0
    %v1193 = vadd.f32 0.0, %v1192
    %v1194 = vpop.f32.mrb[0].mxu0
    %v1195 = vpop.f32.mrb[0].mxu0
    %v1196 = vpop.f32.mrb[0].mxu0
    %1197 = vdwg.mxu0
    %1198 = vmatprep.subr.bf16.mxu0 0
    %1199 = vmatpush1.bf16.xpose.msra.mxu0 %v1146
    %1200 = vmatprep.subr.bf16.mxu0 0
    %1201 = vmatpush1.bf16.xpose.msra.mxu0 0
    %1202 = vmatprep.subr.bf16.mxu0 0
    %1203 = vmatpush1.bf16.xpose.msra.mxu0 0
    %1204 = vmatprep.subr.bf16.mxu0 0
    %1205 = vmatpush1.bf16.xpose.msra.mxu0 0
    %1206 = vmatprep.subr.bf16.mxu0 0
    %1207 = vmatpush1.bf16.xpose.msra.mxu0 0
    %1208 = vmatprep.subr.bf16.mxu0 0
    %1209 = vmatpush1.bf16.xpose.msra.mxu0 0
    %1210 = vmatprep.subr.bf16.mxu0 0
    %1211 = vmatpush1.bf16.xpose.msra.mxu0 0
    %1212 = vmatprep.subr.bf16.mxu0 0
    %1213 = vmatpush1.bf16.xpose.msra.mxu0 0
    %1214 = vmatprep.subr.bf16.mxu0 0
    %1215 = vmatpush1.bf16.xpose.msra.mxu0 0
    %1216 = vmatprep.subr.bf16.mxu0 0
    %1217 = vmatpush1.bf16.xpose.msra.mxu0 0
    %1218 = vmatprep.subr.bf16.mxu0 0
    %1219 = vmatpush1.bf16.xpose.msra.mxu0 0
    %1220 = vmatprep.subr.bf16.mxu0 0
    %1221 = vmatpush1.bf16.xpose.msra.mxu0 0
    %1222 = vmatprep.subr.bf16.mxu0 0
    %1223 = vmatpush1.bf16.xpose.msra.mxu0 0
    %1224 = vmatprep.subr.bf16.mxu0 0
    %1225 = vmatpush1.bf16.xpose.msra.mxu0 0
    %1226 = vmatprep.subr.bf16.mxu0 0
    %1227 = vmatpush1.bf16.xpose.msra.mxu0 0
    %1228 = vmatprep.subr.bf16.mxu0 0
    %1229 = vmatpush1.bf16.xpose.msra.mxu0 0
    %1230 = vmatprep.mubr.bf16.mxu0 0
    %1231 = vmatmul.mubr.bf16.gmra.mrb[0].mxu0 %v1154
    %v1232 = vpop.f32.mrb[0].mxu0
    %v1233 = vadd.f32 %v1193, %v1232
    %v1234 = vpop.f32.mrb[0].mxu0
    %v1235 = vpop.f32.mrb[0].mxu0
    %v1236 = vpop.f32.mrb[0].mxu0
    %1237 = vdwg.mxu0
    %s1238 = sld [smem:[#allocation2]]
    %v1239 = vstv %s1238
    %v1240 = vadd.f32 %v1233, %v1239
    %vm1241 = vcmask 57344
    %1242 = vst.msk [vmem:[%s9] sm:$0x1] %vm1241, %v1240
    // Predicated region
    $region46: #{critic_forward.1} parent=1 // pred_check
      _
    $region47: #{critic_forward.1} parent=1 // pred_check_branch
      %1244 = sbr.rel (0) target = $region49
    $region48: #{critic_forward.1} parent=1 // pred_region
      _
    $region49: #{critic_forward.1} parent=1 // pred_fallthru
      _
    // Predicated region
    $region50: #{critic_forward.1} parent=1 // pred_check
      _
    $region51: #{critic_forward.1} parent=1 // pred_check_branch
      %1246 = sbr.rel (0) target = $region53
    $region52: #{critic_forward.1} parent=1 // pred_region
      _
    $region53: #{critic_forward.1} parent=1 // pred_fallthru
      _
    %1247 = vsyncpa [#allocation4], 1
    %1248 = vsyncpa [#allocation6], 1

</llo_original>
